<compile_context>
chip_gen: v6e
topology: v6e:2x2x1
jax: 0.10.0
libtpu: 0.0.40
codegen_flags: <defaults>
</compile_context>

<pallas_src>
import functools

import jax
import jax.numpy as jnp
from jax.experimental import pallas as pl
from jax.experimental.pallas import tpu as pltpu


def _se_kernel(x_ref, w1_ref, w2_ref, o_ref, *, inv_hw):
    """One self-contained batch block: squeeze -> excite -> scale."""
    x = x_ref[...]                                     # (tb, C, HW_pad)
    xf = x.astype(jnp.float32)
    # Squeeze: padded lanes are zero, so sum * 1/(true HW) is the exact mean.
    y = jnp.sum(xf, axis=-1) * inv_hw                  # (tb, C)
    # Excitation: tiny matmuls on the MXU, hidden under the DMA.
    h = jnp.dot(y, w1_ref[...].astype(jnp.float32),
                preferred_element_type=jnp.float32)    # (tb, C//r)
    h = jnp.maximum(h, 0.0)
    s = jnp.dot(h, w2_ref[...].astype(jnp.float32),
                preferred_element_type=jnp.float32)    # (tb, C)
    s = jax.nn.sigmoid(s)
    # Scale: broadcast the per-(batch, channel) gate over the lane axis.
    o_ref[...] = (xf * s[:, :, None]).astype(o_ref.dtype)


def se_layer(x_nchw, w1, w2, *, block_batch=None):
    """x_nchw: (B, C, H, W); w1: (C, C//r); w2: (C//r, C).

    w1/w2 are the nn.Linear weights stored as (in, out) so the kernel uses a
    plain y @ W (i.e. transposed relative to PyTorch's (out, in) storage).
    """
    B, C, H, W = x_nchw.shape
    HW = H * W
    HW_pad = ((HW + 127) // 128) * 128        # keep the lane dim 128-dense
    itemsize = jnp.dtype(x_nchw.dtype).itemsize

    x_flat = x_nchw.reshape(B, C, HW)
    if HW_pad != HW:
        x_flat = jnp.pad(x_flat, ((0, 0), (0, 0), (0, HW_pad - HW)))

    # Batch tile: largest tb that (a) divides B and (b) keeps the double-
    # buffered footprint (2 in + 2 out blocks ~= 4x block bytes) comfortably
    # under the smallest default scoped-VMEM limit (16 MiB on v5e; 32 MiB on
    # v6e/v7x; v7x physical VMEM is 64 MiB).  ~3 MiB blocks -> ~12 MiB.
    if block_batch is None:
        target_block_bytes = 3 * 1024 * 1024
        bytes_per_sample = C * HW_pad * itemsize
        tb = max(1, min(B, target_block_bytes // max(1, bytes_per_sample)))
        while B % tb != 0:
            tb -= 1
    else:
        tb = block_batch
    grid = (B // tb,)

    Cr = w1.shape[1]
    # Advisory cost hint: this op is HBM-traffic bound, flops are negligible.
    cost = pl.CostEstimate(
        flops=2 * B * (C * Cr + Cr * C) + B * C * HW,
        transcendentals=B * C,
        bytes_accessed=2 * B * C * HW_pad * itemsize
        + (w1.size + w2.size) * jnp.dtype(w1.dtype).itemsize,
    )

    out_flat = pl.pallas_call(
        functools.partial(_se_kernel, inv_hw=1.0 / float(HW)),
        out_shape=jax.ShapeDtypeStruct((B, C, HW_pad), x_flat.dtype),
        grid_spec=pltpu.PrefetchScalarGridSpec(
            num_scalar_prefetch=0,
            grid=grid,
            in_specs=[
                pl.BlockSpec((tb, C, HW_pad), lambda i: (i, 0, 0)),
                pl.BlockSpec(w1.shape, lambda i: (0, 0)),
                pl.BlockSpec(w2.shape, lambda i: (0, 0)),
            ],
            out_specs=pl.BlockSpec((tb, C, HW_pad), lambda i: (i, 0, 0)),
        ),
        compiler_params=pltpu.CompilerParams(
            dimension_semantics=("parallel",)),
        cost_estimate=cost,
    )(x_flat, w1, w2)

    if HW_pad != HW:
        out_flat = out_flat[:, :, :HW]
    return out_flat.reshape(B, C, H, W)


def _reference(x, w1, w2):
    y = jnp.mean(x.astype(jnp.float32), axis=(2, 3))   # (B, C)
    h = jnp.maximum(y @ w1.astype(jnp.float32), 0.0)
    s = jax.nn.sigmoid(h @ w2.astype(jnp.float32))
    return (x.astype(jnp.float32) * s[:, :, None, None]).astype(x.dtype)


if __name__ == "__main__":
    key = jax.random.PRNGKey(0)
    kx, k1, k2, kx2 = jax.random.split(key, 4)

    # Case 1: lane-aligned spatial size (H*W = 256).
    B, C, H, W = 2, 8, 16, 16
    reduction = 4
    Cr = C // reduction
    x = jax.random.normal(kx, (B, C, H, W), dtype=jnp.float32)
    w1 = jax.random.normal(k1, (C, Cr), dtype=jnp.float32) * 0.3
    w2 = jax.random.normal(k2, (Cr, C), dtype=jnp.float32) * 0.3

    out = se_layer(x, w1, w2)
    jax.block_until_ready(out)
    ref = _reference(x, w1, w2)
    assert jnp.allclose(out, ref, atol=1e-5, rtol=1e-5), "mismatch (HW=256)"

    # Case 2: non-multiple-of-128 spatial size (H*W = 49) -> padded lanes,
    # mean still divides by the true H*W.
    x2 = jax.random.normal(kx2, (B, C, 7, 7), dtype=jnp.float32)
    out2 = se_layer(x2, w1, w2)
    jax.block_until_ready(out2)
    ref2 = _reference(x2, w1, w2)
    assert jnp.allclose(out2, ref2, atol=1e-5, rtol=1e-5), "mismatch (HW=49)"

    print("KERNEL_OK")
</pallas_src>

<mosaic_0001>
module attributes {stable_mosaic.version = 11 : i64} {
  func.func @_se_kernel(%arg0: i32, %arg1: memref<2x8x256xf32, #tpu.memory_space<vmem>>, %arg2: memref<8x2xf32, #tpu.memory_space<vmem>>, %arg3: memref<2x8xf32, #tpu.memory_space<vmem>>, %arg4: memref<2x8x256xf32, #tpu.memory_space<vmem>>) attributes {dimension_semantics = [#tpu.dimension_semantics<parallel>], iteration_bounds = array<i64: 1>, scalar_prefetch = 0 : i64, scratch_operands = 0 : i64, tpu.core_type = #tpu.core_type<tc>, window_params = [{transform_indices = @transform_0, window_bounds = array<i64: 2, 8, 256>}, {pipeline_mode = #tpu.pipeline_mode<synchronous>, transform_indices = @transform_1, window_bounds = array<i64: 8, 2>}, {pipeline_mode = #tpu.pipeline_mode<synchronous>, transform_indices = @transform_2, window_bounds = array<i64: 2, 8>}, {transform_indices = @transform_3, window_bounds = array<i64: 2, 8, 256>}]} {
    %c0 = arith.constant 0 : index
    %c0_0 = arith.constant 0 : index
    %c0_1 = arith.constant 0 : index
    %0 = vector.load %arg1[%c0, %c0_0, %c0_1] : memref<2x8x256xf32, #tpu.memory_space<vmem>>, vector<2x8x256xf32>
    %cst = arith.constant dense<0.000000e+00> : vector<2x8xf32>
    %1 = vector.multi_reduction <add>, %0, %cst [2] : vector<2x8x256xf32> to vector<2x8xf32>
    %cst_2 = arith.constant 3.906250e-03 : f32
    %2 = vector.broadcast %cst_2 : f32 to vector<2x8xf32>
    %3 = arith.mulf %1, %2 : vector<2x8xf32>
    %c0_3 = arith.constant 0 : index
    %c0_4 = arith.constant 0 : index
    %4 = vector.load %arg2[%c0_3, %c0_4] : memref<8x2xf32, #tpu.memory_space<vmem>>, vector<8x2xf32>
    %cst_5 = arith.constant dense<0.000000e+00> : vector<2x2xf32>
    %5 = tpu.matmul %3, %4, %cst_5 {dimension_numbers = #tpu.dot_dimension_numbers<[1], [0], [0], [1], [0, 0, 1, 1], [], []>} : vector<2x8xf32>, vector<8x2xf32>, vector<2x2xf32> -> vector<2x2xf32>
    %cst_6 = arith.constant 0.000000e+00 : f32
    %6 = vector.broadcast %cst_6 : f32 to vector<2x2xf32>
    %7 = arith.maximumf %5, %6 : vector<2x2xf32>
    %c0_7 = arith.constant 0 : index
    %c0_8 = arith.constant 0 : index
    %8 = vector.load %arg3[%c0_7, %c0_8] : memref<2x8xf32, #tpu.memory_space<vmem>>, vector<2x8xf32>
    %cst_9 = arith.constant dense<0.000000e+00> : vector<2x8xf32>
    %9 = tpu.matmul %7, %8, %cst_9 {dimension_numbers = #tpu.dot_dimension_numbers<[1], [0], [0], [1], [0, 0, 1, 1], [], []>} : vector<2x2xf32>, vector<2x8xf32>, vector<2x8xf32> -> vector<2x8xf32>
    %10 = arith.negf %9 : vector<2x8xf32>
    %11 = math.exp %10 : vector<2x8xf32>
    %cst_10 = arith.constant 1.000000e+00 : f32
    %12 = vector.broadcast %cst_10 : f32 to vector<2x8xf32>
    %13 = arith.addf %12, %11 : vector<2x8xf32>
    %14 = arith.divf %12, %13 : vector<2x8xf32>
    %15 = vector.shape_cast %14 : vector<2x8xf32> to vector<2x8x1xf32>
    %16 = vector.broadcast %15 : vector<2x8x1xf32> to vector<2x8x256xf32>
    %17 = arith.mulf %0, %16 : vector<2x8x256xf32>
    %c0_11 = arith.constant 0 : index
    %c0_12 = arith.constant 0 : index
    %c0_13 = arith.constant 0 : index
    %18 = vector.load %arg4[%c0_11, %c0_12, %c0_13] : memref<2x8x256xf32, #tpu.memory_space<vmem>>, vector<2x8x256xf32>
    tpu.vector_store %arg4[%c0_11, %c0_12, %c0_13], %17 {strides = array<i32>} : memref<2x8x256xf32, #tpu.memory_space<vmem>>, vector<2x8x256xf32>,
    return
  }
  func.func @transform_0(%arg0: i32) -> (i32, i32, i32) {
    %c0_i32 = arith.constant 0 : i32
    %c0_i32_0 = arith.constant 0 : i32
    %c0_i32_1 = arith.constant 0 : i32
    return %arg0, %c0_i32, %c0_i32_0 : i32, i32, i32
  }
  func.func @transform_1(%arg0: i32) -> (i32, i32) {
    %c0_i32 = arith.constant 0 : i32
    %c0_i32_0 = arith.constant 0 : i32
    %c0_i32_1 = arith.constant 0 : i32
    return %c0_i32, %c0_i32_0 : i32, i32
  }
  func.func @transform_2(%arg0: i32) -> (i32, i32) {
    %c0_i32 = arith.constant 0 : i32
    %c0_i32_0 = arith.constant 0 : i32
    %c0_i32_1 = arith.constant 0 : i32
    return %c0_i32, %c0_i32_0 : i32, i32
  }
  func.func @transform_3(%arg0: i32) -> (i32, i32, i32) {
    %c0_i32 = arith.constant 0 : i32
    %c0_i32_0 = arith.constant 0 : i32
    %c0_i32_1 = arith.constant 0 : i32
    return %arg0, %c0_i32, %c0_i32_0 : i32, i32, i32
  }
}

</mosaic_0001>

<llo_original>
// kernel: tpu_custom_call.1
$region0: #{tpu_custom_call.1}
  #allocation0 [shape = 'u32[]', space=smem, size = 0x4, offset = 0x4, fixed_abs, tag = 'smem constant byte address 0x4 - core index']
  #allocation1 [shape = 'u32[144,128]{1,0:T(1,128)}', space=vmem, size = 0x12000, scoped, tag = 'internal scratch']
  %s0 = inlined_call_operand.hbm [shape: f32[2,8,256], index: 0, kind: input, shape index: {}]
  %s1 = inlined_call_operand.vmem [shape: f32[8,2], index: 1, kind: input, shape index: {}]
  %s2 = inlined_call_operand.vmem [shape: f32[2,8], index: 2, kind: input, shape index: {}]
  %s3 = inlined_call_operand.hbm [shape: f32[2,8,256], index: 3, kind: output, shape index: {}]
  %s4 = sld [smem:[#allocation0]]
  $region26: #{tpu_custom_call.1} parent=0
    _
  %s6 = ssub.s32 1, %s4
  %s7 = scalar_select 0, %s6, %s4
  $region1: #{tpu_custom_call.1} parent=0
    #allocation2 [shape = 'u8[16384]{0}', space=vmem, size = 0x4000, scoped, tag = 'input window, operand 0, single buffered']
    #allocation3 [shape = 's32[1]{0}', space=sflag, size = 0x4, scoped, tag = 'scoped memory for tpu_custom_call.1']
    #allocation4 [shape = 's32[1]{0}', space=sflag, size = 0x4, scoped, tag = 'scoped memory for tpu_custom_call.1']
    #allocation5 [shape = 'u8[16384]{0}', space=vmem, size = 0x4000, scoped, tag = 'output window, operand 0, single buffered']
    %8 = vsyncpa [#allocation3], 0
    %9 = vsyncpa [#allocation4], 0
    // Predicated region
    $region2: #{tpu_custom_call.1} parent=1 // pred_check
      _
    $region3: #{tpu_custom_call.1} parent=1 // pred_check_branch
      %11 = sbr.rel (0) target = $region5
    $region4: #{tpu_custom_call.1} parent=1 // pred_region
      %s13 = ssub.s32 512, 512
      %14 = vsyncadd [#allocation3], %s13
      %s15 = sshll.u32 [#allocation2], 4
      %s16 = int_to_ptr.vmem [resolvable:$true] %s15
      %21 = dma.hbm_to_vmem [thread:$0]  %s0, 512, %s16, [#allocation3], 256, 256, 16
    $region5: #{tpu_custom_call.1} parent=1 // pred_fallthru
      _
    // Predicated region
    $region6: #{tpu_custom_call.1} parent=1 // pred_check
      _
    $region7: #{tpu_custom_call.1} parent=1 // pred_check_branch
      %23 = sbr.rel (0) target = $region9
    $region8: #{tpu_custom_call.1} parent=1 // pred_region
      _
    $region9: #{tpu_custom_call.1} parent=1 // pred_fallthru
      _
    // Predicated region
    $region10: #{tpu_custom_call.1} parent=1 // pred_check
      _
    $region11: #{tpu_custom_call.1} parent=1 // pred_check_branch
      %25 = sbr.rel (0) target = $region13
    $region12: #{tpu_custom_call.1} parent=1 // pred_region
      _
    $region13: #{tpu_custom_call.1} parent=1 // pred_fallthru
      _
    // Predicated region
    $region14: #{tpu_custom_call.1} parent=1 // pred_check
      _
    $region15: #{tpu_custom_call.1} parent=1 // pred_check_branch
      %27 = sbr.rel (0) target = $region17
    $region16: #{tpu_custom_call.1} parent=1 // pred_region
      %28 = dma.done [#allocation3], 512
    $region17: #{tpu_custom_call.1} parent=1 // pred_fallthru
      _
    %v29 = vld [vmem:[#allocation2] sm:$0xff]
    %v30 = vld [vmem:[#allocation2 + $0x8] sm:$0xff]
    %v31 = vld [vmem:[#allocation2 + $0x10] sm:$0xff]
    %v32 = vld [vmem:[#allocation2 + $0x18] sm:$0xff]
    %v33 = vadd.f32 %v29, %v30
    %34 = vadd.xlane.f32.xlu0 %v33
    %v35 = vpop.xlane.xlu0 %34
    %v36 = vadd.f32 %v31, %v32
    %37 = vadd.xlane.f32.xlu0 %v36
    %v38 = vpop.xlane.xlu0 %37
    %v39 = vmul.f32 %v35, 0.00390625
    %v40 = vmul.f32 %v38, 0.00390625
    %v41 = vld [vmem:[%s1] sm:$0xff]
    %v44 = vlaneseq
    %v45 = vand.u32 %v44, 127
    %v46 = vlaneseq
    %v47 = vshrl.u32 %v46, 7
    %v48 = vsub.s32 %v45, %v47
    %v49 = vrot.slane %v39, %v48
    %v50 = vlaneseq
    %v51 = vshrl.u32 %v50, 7
    %v52 = vsub.s32 %v45, %v51
    %v53 = vrot.slane %v40, %v52
    %vm54 = vcmask 1041409
    %v55 = vsel %vm54, %v53, %v49
    %vm56 = vcmask 64512
    %v57 = vsel %vm56, %v55, 0
    %59 = vmatprep.subr.mxu0 0.0
    %60 = vmatpush1.msra.mxu0 0.0
    %61 = vmatprep.subr.mxu0 0.0
    %62 = vmatpush1.msra.mxu0 0.0
    %63 = vmatprep.subr.mxu0 0.0
    %64 = vmatpush1.msra.mxu0 0.0
    %65 = vmatprep.subr.mxu0 0.0
    %66 = vmatpush1.msra.mxu0 0.0
    %67 = vmatprep.subr.mxu0 0.0
    %68 = vmatpush1.msra.mxu0 0.0
    %69 = vmatprep.subr.mxu0 0.0
    %70 = vmatpush1.msra.mxu0 0.0
    %71 = vmatprep.subr.mxu0 0.0
    %72 = vmatpush1.msra.mxu0 0.0
    %73 = vmatprep.subr.mxu0 0.0
    %74 = vmatpush1.msra.mxu0 0.0
    %75 = vmatprep.subr.mxu0 0.0
    %76 = vmatpush1.msra.mxu0 0.0
    %77 = vmatprep.subr.mxu0 0.0
    %78 = vmatpush1.msra.mxu0 0.0
    %79 = vmatprep.subr.mxu0 0.0
    %80 = vmatpush1.msra.mxu0 0.0
    %81 = vmatprep.subr.mxu0 0.0
    %82 = vmatpush1.msra.mxu0 0.0
    %83 = vmatprep.subr.mxu0 0.0
    %84 = vmatpush1.msra.mxu0 0.0
    %85 = vmatprep.subr.mxu0 0.0
    %86 = vmatpush1.msra.mxu0 0.0
    %87 = vmatprep.subr.mxu0 0.0
    %88 = vmatpush1.msra.mxu0 0.0
    %89 = vmatprep.subr.mxu0 0.0
    %90 = vmatpush1.msra.mxu0 %v41
    %91 = vmatprep.subr.mxu0 0.0
    %92 = vmatpush2.msra.mxu0 0.0
    %93 = vmatprep.subr.mxu0 0.0
    %94 = vmatpush2.msra.mxu0 0.0
    %95 = vmatprep.subr.mxu0 0.0
    %96 = vmatpush2.msra.mxu0 0.0
    %97 = vmatprep.subr.mxu0 0.0
    %98 = vmatpush2.msra.mxu0 0.0
    %99 = vmatprep.subr.mxu0 0.0
    %100 = vmatpush2.msra.mxu0 0.0
    %101 = vmatprep.subr.mxu0 0.0
    %102 = vmatpush2.msra.mxu0 0.0
    %103 = vmatprep.subr.mxu0 0.0
    %104 = vmatpush2.msra.mxu0 0.0
    %105 = vmatprep.subr.mxu0 0.0
    %106 = vmatpush2.msra.mxu0 0.0
    %107 = vmatprep.subr.mxu0 0.0
    %108 = vmatpush2.msra.mxu0 0.0
    %109 = vmatprep.subr.mxu0 0.0
    %110 = vmatpush2.msra.mxu0 0.0
    %111 = vmatprep.subr.mxu0 0.0
    %112 = vmatpush2.msra.mxu0 0.0
    %113 = vmatprep.subr.mxu0 0.0
    %114 = vmatpush2.msra.mxu0 0.0
    %115 = vmatprep.subr.mxu0 0.0
    %116 = vmatpush2.msra.mxu0 0.0
    %117 = vmatprep.subr.mxu0 0.0
    %118 = vmatpush2.msra.mxu0 0.0
    %119 = vmatprep.subr.mxu0 0.0
    %120 = vmatpush2.msra.mxu0 0.0
    %121 = vmatprep.subr.mxu0 0.0
    %122 = vmatpush2.msra.mxu0 0.0
    %123 = vmatprep.mubr.f32.mxu0 0.0
    %124 = vmatmul.mubr.f32.gmra.mxu0 %v57
    %v125 = vpop.f32.mrf.mxu0
    %v126 = vadd.f32 0.0, %v125
    %v127 = vpop.f32.mrf.mxu0
    %128 = vdwg.mxu0
    %v129 = vmax.f32 %v126, 0.0
    %v130 = vld [vmem:[%s2] sm:$0x3]
    %vm131 = vcmask 15360
    %v133 = vsel %vm131, %v129, 0
    %vm135 = vcmask 1041408
    %v137 = vsel %vm135, %v130, 0
    %139 = vmatprep.subr.mxu0 0.0
    %140 = vmatpush1.msra.mxu0 0.0
    %141 = vmatprep.subr.mxu0 0.0
    %142 = vmatpush1.msra.mxu0 0.0
    %143 = vmatprep.subr.mxu0 0.0
    %144 = vmatpush1.msra.mxu0 0.0
    %145 = vmatprep.subr.mxu0 0.0
    %146 = vmatpush1.msra.mxu0 0.0
    %147 = vmatprep.subr.mxu0 0.0
    %148 = vmatpush1.msra.mxu0 0.0
    %149 = vmatprep.subr.mxu0 0.0
    %150 = vmatpush1.msra.mxu0 0.0
    %151 = vmatprep.subr.mxu0 0.0
    %152 = vmatpush1.msra.mxu0 0.0
    %153 = vmatprep.subr.mxu0 0.0
    %154 = vmatpush1.msra.mxu0 0.0
    %155 = vmatprep.subr.mxu0 0.0
    %156 = vmatpush1.msra.mxu0 0.0
    %157 = vmatprep.subr.mxu0 0.0
    %158 = vmatpush1.msra.mxu0 0.0
    %159 = vmatprep.subr.mxu0 0.0
    %160 = vmatpush1.msra.mxu0 0.0
    %161 = vmatprep.subr.mxu0 0.0
    %162 = vmatpush1.msra.mxu0 0.0
    %163 = vmatprep.subr.mxu0 0.0
    %164 = vmatpush1.msra.mxu0 0.0
    %165 = vmatprep.subr.mxu0 0.0
    %166 = vmatpush1.msra.mxu0 0.0
    %167 = vmatprep.subr.mxu0 0.0
    %168 = vmatpush1.msra.mxu0 0.0
    %169 = vmatprep.subr.mxu0 0.0
    %170 = vmatpush1.msra.mxu0 %v137
    %171 = vmatprep.subr.mxu0 0.0
    %172 = vmatpush2.msra.mxu0 0.0
    %173 = vmatprep.subr.mxu0 0.0
    %174 = vmatpush2.msra.mxu0 0.0
    %175 = vmatprep.subr.mxu0 0.0
    %176 = vmatpush2.msra.mxu0 0.0
    %177 = vmatprep.subr.mxu0 0.0
    %178 = vmatpush2.msra.mxu0 0.0
    %179 = vmatprep.subr.mxu0 0.0
    %180 = vmatpush2.msra.mxu0 0.0
    %181 = vmatprep.subr.mxu0 0.0
    %182 = vmatpush2.msra.mxu0 0.0
    %183 = vmatprep.subr.mxu0 0.0
    %184 = vmatpush2.msra.mxu0 0.0
    %185 = vmatprep.subr.mxu0 0.0
    %186 = vmatpush2.msra.mxu0 0.0
    %187 = vmatprep.subr.mxu0 0.0
    %188 = vmatpush2.msra.mxu0 0.0
    %189 = vmatprep.subr.mxu0 0.0
    %190 = vmatpush2.msra.mxu0 0.0
    %191 = vmatprep.subr.mxu0 0.0
    %192 = vmatpush2.msra.mxu0 0.0
    %193 = vmatprep.subr.mxu0 0.0
    %194 = vmatpush2.msra.mxu0 0.0
    %195 = vmatprep.subr.mxu0 0.0
    %196 = vmatpush2.msra.mxu0 0.0
    %197 = vmatprep.subr.mxu0 0.0
    %198 = vmatpush2.msra.mxu0 0.0
    %199 = vmatprep.subr.mxu0 0.0
    %200 = vmatpush2.msra.mxu0 0.0
    %201 = vmatprep.subr.mxu0 0.0
    %202 = vmatpush2.msra.mxu0 0.0
    %203 = vmatprep.mubr.f32.mxu0 0.0
    %204 = vmatmul.mubr.f32.gmra.mxu0 %v133
    %v205 = vpop.f32.mrf.mxu0
    %v206 = vadd.f32 0.0, %v205
    %v207 = vpop.f32.mrf.mxu0
    %208 = vdwg.mxu0
    %v209 = vxor.u32 %v206, 2147483648
    %v210 = vmul.f32 %v209, 1.442695
    %v211 = vpow.pop %v210
    %v212 = vadd.f32 %v211, 1.0
    %v213 = vrcp.pop %v212
    %v214 = vmul.f32 1.0, %v213
    %v215 = vlaneseq
    %v216 = vshrl.u32 %v215, 7
    %v217 = vsub.s32 0, %v216
    %v218 = vrot.slane %v214, %v217
    %220 = vbcast.lane.b32.xlu0 %v218, 256
    %v221 = vpop.permute.xlu0 %220
    %v222 = vlaneseq
    %v223 = vshrl.u32 %v222, 7
    %v224 = vsub.s32 1, %v223
    %v225 = vrot.slane %v214, %v224
    %227 = vbcast.lane.b32.xlu0 %v225, 256
    %v228 = vpop.permute.xlu0 %227
    %v229 = vmul.f32 %v29, %v221
    %v230 = vmul.f32 %v30, %v221
    %v231 = vmul.f32 %v31, %v228
    %v232 = vmul.f32 %v32, %v228
    %233 = vst [vmem:[#allocation5] sm:$0xff] %v229
    %234 = vst [vmem:[#allocation5 + $0x8] sm:$0xff] %v230
    %235 = vst [vmem:[#allocation5 + $0x10] sm:$0xff] %v231
    %236 = vst [vmem:[#allocation5 + $0x18] sm:$0xff] %v232
    // Predicated region
    $region18: #{tpu_custom_call.1} parent=1 // pred_check
      _
    $region19: #{tpu_custom_call.1} parent=1 // pred_check_branch
      %238 = sbr.rel (0) target = $region21
    $region20: #{tpu_custom_call.1} parent=1 // pred_region
      %s240 = ssub.s32 512, 512
      %241 = vsyncadd [#allocation4], %s240
      %s242 = sshll.u32 [#allocation5], 4
      %s243 = int_to_ptr.vmem [resolvable:$true] %s242
      %248 = dma.vmem_to_hbm [thread:$0]  %s243, 512, %s3, [#allocation4], 256, 256, 16
    $region21: #{tpu_custom_call.1} parent=1 // pred_fallthru
      _
    // Predicated region
    $region22: #{tpu_custom_call.1} parent=1 // pred_check
      _
    $region23: #{tpu_custom_call.1} parent=1 // pred_check_branch
      %250 = sbr.rel (0) target = $region25
    $region24: #{tpu_custom_call.1} parent=1 // pred_region
      %251 = dma.done [#allocation4], 512
    $region25: #{tpu_custom_call.1} parent=1 // pred_fallthru
      _
    %252 = vsyncpa [#allocation3], 1
    %253 = vsyncpa [#allocation4], 1

</llo_original>
